<compile_context>
chip_gen: v7x
topology: tpu7x:2x2x1
jax: 0.10.0
libtpu: 0.0.40
codegen_flags: <defaults>
</compile_context>

<pallas_src>
import jax
import jax.numpy as jnp
from jax.experimental import pallas as pl
from jax.experimental.pallas import tpu as pltpu


def _round_up(x, m):
    return (x + m - 1) // m * m


def _cdiv(a, b):
    return (a + b - 1) // b


def _tpu_defaults():
    """Per-generation (default row tile, usable VMEM cap) derived from the hardware."""
    try:
        vmem_cap = int(pltpu.get_tpu_info().vmem_capacity_bytes)
    except Exception:
        vmem_cap = 64 << 20                      # conservative (v7x-sized) fallback
    try:
        kind = jax.devices()[0].device_kind.lower()
    except Exception:
        kind = ""
    if "v5 lite" in kind or "v5lite" in kind or "v5e" in kind:
        tm = 256          # v5e roofline knee ~240 FLOPs per weight byte
    elif "v7" in kind:
        tm = 512          # v7x knee ~310 FLOPs/byte, only 64 MiB VMEM
    else:
        tm = 1024         # v6e knee ~715 FLOPs/byte, 128 MiB VMEM
    usable = int(vmem_cap * 0.82)                # headroom for internal scratch / dbl-buffers
    return tm, usable


def _post_process_kernel(x_ref, w_ref, b_ref, o_ref, acc_ref):
    # x_ref: (tm, tk) in x.dtype   w_ref: (tk, tn) bf16   b_ref: (1, tn) f32
    # o_ref: (tm, tn) out dtype    acc_ref: (tm, tn) f32 scratch
    k = pl.program_id(2)

    @pl.when(k == 0)
    def _init():
        acc_ref[...] = jnp.zeros_like(acc_ref)

    # Cast x in-kernel (removes a wrapper-side HBM pass); MXU bf16 matmul, f32 accumulation.
    acc_ref[...] += jnp.dot(x_ref[...].astype(w_ref.dtype), w_ref[...],
                            preferred_element_type=jnp.float32)

    @pl.when(k == pl.num_programs(2) - 1)
    def _finalize():
        y = acc_ref[...] + b_ref[...]                       # bias broadcast (f32)
        # use_norm=False -> BatchNorm is Identity; Dropout(p=0.0) is identity.
        o_ref[...] = jnp.maximum(y, 0.0).astype(o_ref.dtype)   # ReLU


def prepare_post_process_params(weight_t, bias, compute_dtype=jnp.bfloat16):
    """One-time parameter setup: pad K/N to multiples of 128, cast the weight to the
    MXU compute dtype and the bias to f32.  Do this once, not per forward call."""
    K, N = weight_t.shape
    Kp, Np = _round_up(K, 128), _round_up(N, 128)
    wp = jnp.pad(weight_t, ((0, Kp - K), (0, Np - N))).astype(compute_dtype)
    bp = jnp.pad(bias, (0, Np - N)).astype(jnp.float32).reshape(1, Np)
    return wp, bp, N


def post_process_layer(x, w_padded, b_padded, out_dim, *, tm=None, tn=256, tk=None,
                       out_dtype=None):
    """Fused Linear(+bias) -> Identity -> ReLU -> Dropout(p=0) forward.

    x:         (M, K)   activations (f32 or bf16; cast to bf16 in-kernel)
    w_padded:  (Kp, Np) pre-padded bf16 weight from prepare_post_process_params
    b_padded:  (1, Np)  pre-padded f32 bias
    out_dim:   logical N (pre-padding)
    Returns:   (M, out_dim) in out_dtype (default x.dtype)
    """
    M, K = x.shape
    Kp, Np = w_padded.shape
    assert Kp >= K and Kp % 128 == 0 and Np % 128 == 0 and out_dim <= Np
    out_dtype = x.dtype if out_dtype is None else out_dtype

    tm_default, vmem_cap = _tpu_defaults()
    tm = tm_default if tm is None else tm

    # --- M tiling: near-full last tile, 16-row granularity ---
    m_tiles = max(1, _cdiv(M, tm))
    tm_eff = min(_round_up(_cdiv(M, m_tiles), 16), _round_up(M, 16))
    Mp = m_tiles * tm_eff

    # --- N tiling: a multiple of 128 that divides Np ---
    tn_eff = max(128, (min(tn, Np) // 128) * 128)
    while Np % tn_eff:
        tn_eff -= 128

    x_bytes = jnp.dtype(x.dtype).itemsize
    w_bytes = jnp.dtype(w_padded.dtype).itemsize
    out_bytes = jnp.dtype(out_dtype).itemsize

    def footprint(tm_, tk_):
        # double-buffered x/w/out/bias tiles + f32 accumulator, +25% headroom
        return int(1.25 * (2 * (tm_ * tk_ * x_bytes + tk_ * tn_eff * w_bytes
                                + tm_ * tn_eff * out_bytes + tn_eff * 4)
                           + tm_ * tn_eff * 4))

    # --- K tiling: largest 128-multiple divisor of Kp whose tiles fit the VMEM cap ---
    if tk is None:
        divisors = [d for d in range(128, Kp + 1, 128) if Kp % d == 0]
        fitting = [d for d in divisors if footprint(tm_eff, d) <= vmem_cap]
        tk = max(fitting) if fitting else 128
    assert Kp % tk == 0 and tk % 128 == 0
    # Last-resort: shrink the row tile if even the chosen tk does not fit.
    while footprint(tm_eff, tk) > vmem_cap and tm_eff > 16:
        tm_eff = max(16, _round_up(tm_eff // 2, 16))
        m_tiles = _cdiv(M, tm_eff)
        Mp = m_tiles * tm_eff

    # Pad x only when the logical shape is not already grid-aligned.
    if (Mp, Kp) != (M, K):
        x_in = jnp.pad(x, ((0, Mp - M), (0, Kp - K)))
    else:
        x_in = x

    n_tiles = Np // tn_eff
    k_tiles = Kp // tk
    # N-tiles lead: on a megacore split the two TensorCores each stream half the weight.
    grid = (n_tiles, m_tiles, k_tiles)

    vmem_limit = int(min(vmem_cap, max(32 << 20, footprint(tm_eff, tk))))

    cost = pl.CostEstimate(
        flops=2 * Mp * Kp * Np,
        transcendentals=0,
        bytes_accessed=int(n_tiles * Mp * Kp * x_bytes        # x re-streamed per N tile
                           + m_tiles * Kp * Np * w_bytes      # weight re-streamed per M tile
                           + Mp * Np * out_bytes + Np * 4),
    )

    out = pl.pallas_call(
        _post_process_kernel,
        out_shape=jax.ShapeDtypeStruct((Mp, Np), out_dtype),
        grid_spec=pltpu.PrefetchScalarGridSpec(
            num_scalar_prefetch=0,
            grid=grid,
            in_specs=[
                pl.BlockSpec((tm_eff, tk), lambda j, i, k: (i, k)),      # x row tile
                pl.BlockSpec((tk, tn_eff), lambda j, i, k: (k, j)),      # weight tile
                pl.BlockSpec((1, tn_eff), lambda j, i, k: (0, j)),       # bias (refetched only when j changes)
            ],
            out_specs=pl.BlockSpec((tm_eff, tn_eff), lambda j, i, k: (i, j)),
            scratch_shapes=[pltpu.VMEM((tm_eff, tn_eff), jnp.float32)],
        ),
        compiler_params=pltpu.CompilerParams(
            dimension_semantics=("parallel", "parallel", "arbitrary"),
            vmem_limit_bytes=vmem_limit),
        cost_estimate=cost,
    )(x_in, w_padded, b_padded)

    return out[:M, :out_dim]


def reference(x, weight_t, bias, compute_dtype=jnp.bfloat16):
    # Matches the kernel's numerics: bf16 inputs, f32 accumulation, f32 bias + ReLU.
    xc = x.astype(compute_dtype)
    wc = weight_t.astype(compute_dtype)
    y = jnp.dot(xc, wc, preferred_element_type=jnp.float32) + bias.astype(jnp.float32)
    return jnp.maximum(y, 0.0).astype(x.dtype)


if __name__ == "__main__":
    key = jax.random.PRNGKey(0)
    kx, kw, kb, kx2, kw2, kb2 = jax.random.split(key, 6)

    # --- Test 1: small shapes from the module (single grid cell, K/N padded to 128) ---
    batch, in_dim, out_dim = 8, 32, 64
    bound = 1.0 / (in_dim ** 0.5)
    weight = jax.random.uniform(kw, (out_dim, in_dim), jnp.float32, -bound, bound)
    bias = jax.random.uniform(kb, (out_dim,), jnp.float32, -bound, bound)
    weight_t = weight.T                              # (in_dim, out_dim)
    x = jax.random.normal(kx, (batch, in_dim), jnp.float32)

    wp, bp, n_out = prepare_post_process_params(weight_t, bias)
    out = jax.block_until_ready(post_process_layer(x, wp, bp, n_out))
    ref = reference(x, weight_t, bias)
    assert out.shape == (batch, out_dim)
    assert jnp.allclose(out, ref, atol=2e-3, rtol=2e-3), "test1 mismatch vs reference"

    # --- Test 2: multi-tile (M, N, K all tiled) to exercise index_maps, the K-axis
    #             accumulator, and the padding slice-off, with small explicit tiles ---
    M2, K2, N2 = 300, 384, 512
    bound2 = 1.0 / (K2 ** 0.5)
    w2_t = jax.random.uniform(kw2, (K2, N2), jnp.float32, -bound2, bound2)
    b2 = jax.random.uniform(kb2, (N2,), jnp.float32, -bound2, bound2)
    x2 = jax.random.normal(kx2, (M2, K2), jnp.float32)

    wp2, bp2, n_out2 = prepare_post_process_params(w2_t, b2)
    out2 = jax.block_until_ready(
        post_process_layer(x2, wp2, bp2, n_out2, tm=128, tn=256, tk=128))
    ref2 = reference(x2, w2_t, b2)
    assert out2.shape == (M2, N2)
    assert jnp.allclose(out2, ref2, atol=2e-3, rtol=2e-3), "test2 mismatch vs reference"

    print("KERNEL_OK")
</pallas_src>

<mosaic_0001>
module attributes {stable_mosaic.version = 11 : i64} {
  func.func @_post_process_kernel(%arg0: i32, %arg1: i32, %arg2: i32, %arg3: memref<16x128xf32, #tpu.memory_space<vmem>>, %arg4: memref<128x128xbf16, #tpu.memory_space<vmem>>, %arg5: memref<1x128xf32, #tpu.memory_space<vmem>>, %arg6: memref<16x128xf32, #tpu.memory_space<vmem>>, %arg7: memref<16x128xf32, #tpu.memory_space<vmem>>) attributes {dimension_semantics = [#tpu.dimension_semantics<parallel>, #tpu.dimension_semantics<parallel>, #tpu.dimension_semantics<arbitrary>], iteration_bounds = array<i64: 1, 1, 1>, scalar_prefetch = 0 : i64, scratch_operands = 1 : i64, tpu.core_type = #tpu.core_type<tc>, window_params = [{transform_indices = @transform_0, window_bounds = array<i64: 16, 128>}, {transform_indices = @transform_1, window_bounds = array<i64: 128, 128>}, {transform_indices = @transform_2, window_bounds = array<i64: 1, 128>}, {transform_indices = @transform_3, window_bounds = array<i64: 16, 128>}]} {
    %c0_i32 = arith.constant 0 : i32
    %0 = arith.cmpi eq, %arg2, %c0_i32 : i32
    %1 = arith.extui %0 : i1 to i32
    %c0_i32_0 = arith.constant 0 : i32
    %2 = arith.cmpi ne, %1, %c0_i32_0 : i32
    scf.if %2 {
      %cst_10 = arith.constant 0.000000e+00 : f32
      %13 = vector.broadcast %cst_10 : f32 to vector<16x128xf32>
      %c0_11 = arith.constant 0 : index
      %c0_12 = arith.constant 0 : index
      %14 = vector.load %arg7[%c0_11, %c0_12] : memref<16x128xf32, #tpu.memory_space<vmem>>, vector<16x128xf32>
      tpu.vector_store %arg7[%c0_11, %c0_12], %13 {strides = array<i32>} : memref<16x128xf32, #tpu.memory_space<vmem>>, vector<16x128xf32>,
    } else {
    }
    %c0 = arith.constant 0 : index
    %c0_1 = arith.constant 0 : index
    %3 = vector.load %arg7[%c0, %c0_1] : memref<16x128xf32, #tpu.memory_space<vmem>>, vector<16x128xf32>
    %c0_2 = arith.constant 0 : index
    %c0_3 = arith.constant 0 : index
    %4 = vector.load %arg3[%c0_2, %c0_3] : memref<16x128xf32, #tpu.memory_space<vmem>>, vector<16x128xf32>
    %5 = arith.truncf %4 : vector<16x128xf32> to vector<16x128xbf16>
    %c0_4 = arith.constant 0 : index
    %c0_5 = arith.constant 0 : index
    %6 = vector.load %arg4[%c0_4, %c0_5] : memref<128x128xbf16, #tpu.memory_space<vmem>>, vector<128x128xbf16>
    %cst = arith.constant dense<0.000000e+00> : vector<16x128xf32>
    %7 = tpu.matmul %5, %6, %cst {dimension_numbers = #tpu.dot_dimension_numbers<[1], [0], [0], [1], [0, 0, 1, 1], [], []>} : vector<16x128xbf16>, vector<128x128xbf16>, vector<16x128xf32> -> vector<16x128xf32>
    %8 = arith.addf %3, %7 : vector<16x128xf32>
    %c0_6 = arith.constant 0 : index
    %c0_7 = arith.constant 0 : index
    %9 = vector.load %arg7[%c0_6, %c0_7] : memref<16x128xf32, #tpu.memory_space<vmem>>, vector<16x128xf32>
    tpu.vector_store %arg7[%c0_6, %c0_7], %8 {strides = array<i32>} : memref<16x128xf32, #tpu.memory_space<vmem>>, vector<16x128xf32>,
    %c0_i32_8 = arith.constant 0 : i32
    %10 = arith.cmpi eq, %arg2, %c0_i32_8 : i32
    %11 = arith.extui %10 : i1 to i32
    %c0_i32_9 = arith.constant 0 : i32
    %12 = arith.cmpi ne, %11, %c0_i32_9 : i32
    scf.if %12 {
      %c0_10 = arith.constant 0 : index
      %c0_11 = arith.constant 0 : index
      %13 = vector.load %arg7[%c0_10, %c0_11] : memref<16x128xf32, #tpu.memory_space<vmem>>, vector<16x128xf32>
      %c0_12 = arith.constant 0 : index
      %c0_13 = arith.constant 0 : index
      %14 = vector.load %arg5[%c0_12, %c0_13] : memref<1x128xf32, #tpu.memory_space<vmem>>, vector<1x128xf32>
      %15 = vector.broadcast %14 : vector<1x128xf32> to vector<16x128xf32>
      %16 = arith.addf %13, %15 : vector<16x128xf32>
      %cst_14 = arith.constant 0.000000e+00 : f32
      %17 = vector.broadcast %cst_14 : f32 to vector<16x128xf32>
      %18 = arith.maximumf %16, %17 : vector<16x128xf32>
      %c0_15 = arith.constant 0 : index
      %c0_16 = arith.constant 0 : index
      %19 = vector.load %arg6[%c0_15, %c0_16] : memref<16x128xf32, #tpu.memory_space<vmem>>, vector<16x128xf32>
      tpu.vector_store %arg6[%c0_15, %c0_16], %18 {strides = array<i32>} : memref<16x128xf32, #tpu.memory_space<vmem>>, vector<16x128xf32>,
    } else {
    }
    return
  }
  func.func @transform_0(%arg0: i32, %arg1: i32, %arg2: i32) -> (i32, i32) {
    %c0_i32 = arith.constant 0 : i32
    return %arg1, %arg2 : i32, i32
  }
  func.func @transform_1(%arg0: i32, %arg1: i32, %arg2: i32) -> (i32, i32) {
    %c0_i32 = arith.constant 0 : i32
    return %arg2, %arg0 : i32, i32
  }
  func.func @transform_2(%arg0: i32, %arg1: i32, %arg2: i32) -> (i32, i32) {
    %c0_i32 = arith.constant 0 : i32
    %c0_i32_0 = arith.constant 0 : i32
    return %c0_i32, %arg0 : i32, i32
  }
  func.func @transform_3(%arg0: i32, %arg1: i32, %arg2: i32) -> (i32, i32) {
    %c0_i32 = arith.constant 0 : i32
    return %arg1, %arg0 : i32, i32
  }
}

</mosaic_0001>

<llo_original>
// kernel: tpu_custom_call.1
$region0: #{tpu_custom_call.1}
  #allocation0 [shape = 'u32[]', space=smem, size = 0x4, offset = 0x4, fixed_abs, tag = 'smem constant byte address 0x4 - core index']
  #allocation1 [shape = 'u32[144,128]{1,0:T(1,128)}', space=vmem, size = 0x12000, scoped, tag = 'internal scratch']
  #allocation2 [shape = 'f32[16,128]{1,0:T(8,128)}', space=vmem, size = 0x2000, scoped, tag = 'scratch operand']
  %s0 = inlined_call_operand.hbm [shape: f32[16,128], index: 0, kind: input, shape index: {}]
  %s1 = inlined_call_operand.hbm [shape: bf16[128,128], index: 1, kind: input, shape index: {}]
  %s2 = inlined_call_operand.vmem [shape: f32[1,128], index: 2, kind: input, shape index: {}]
  %s3 = inlined_call_operand.hbm [shape: f32[16,128], index: 3, kind: output, shape index: {}]
  %s4 = sld [smem:[#allocation0]]
  $region38: #{tpu_custom_call.1} parent=0
    _
  %s6 = ssub.s32 1, %s4
  %s7 = scalar_select 0, %s6, %s4
  $region1: #{tpu_custom_call.1} parent=0
    #allocation3 [shape = 'u8[8192]{0}', space=vmem, size = 0x2000, scoped, tag = 'input window, operand 0, single buffered']
    #allocation4 [shape = 's32[1]{0}', space=sflag, size = 0x4, scoped, tag = 'scoped memory for tpu_custom_call.1']
    #allocation5 [shape = 's32[1]{0}', space=sflag, size = 0x4, scoped, tag = 'scoped memory for tpu_custom_call.1']
    #allocation6 [shape = 'u8[32768]{0}', space=vmem, size = 0x8000, scoped, tag = 'input window, operand 1, single buffered']
    #allocation7 [shape = 's32[1]{0}', space=sflag, size = 0x4, scoped, tag = 'scoped memory for tpu_custom_call.1']
    #allocation8 [shape = 'u8[8192]{0}', space=vmem, size = 0x2000, scoped, tag = 'output window, operand 0, single buffered']
    %8 = vsyncpa [#allocation4], 0
    %9 = vsyncpa [#allocation7], 0
    %10 = vsyncpa [#allocation5], 0
    // Predicated region
    $region2: #{tpu_custom_call.1} parent=1 // pred_check
      _
    $region3: #{tpu_custom_call.1} parent=1 // pred_check_branch
      %12 = sbr.rel (0) target = $region5
    $region4: #{tpu_custom_call.1} parent=1 // pred_region
      %s14 = ssub.s32 256, 256
      %15 = vsyncadd [#allocation4], %s14
      %s16 = sshll.u32 [#allocation3], 4
      %s17 = int_to_ptr.vmem [resolvable:$true] %s16
      %22 = dma.hbm_to_vmem [thread:$0]  %s0, 256, %s17, [#allocation4], 128, 128, 8
    $region5: #{tpu_custom_call.1} parent=1 // pred_fallthru
      _
    // Predicated region
    $region6: #{tpu_custom_call.1} parent=1 // pred_check
      _
    $region7: #{tpu_custom_call.1} parent=1 // pred_check_branch
      %24 = sbr.rel (0) target = $region9
    $region8: #{tpu_custom_call.1} parent=1 // pred_region
      %s26 = ssub.s32 1024, 1024
      %27 = vsyncadd [#allocation7], %s26
      %s28 = sshll.u32 [#allocation6], 4
      %s29 = int_to_ptr.vmem [resolvable:$true] %s28
      %34 = dma.hbm_to_vmem [thread:$0]  %s1, 1024, %s29, [#allocation7], 64, 64, 4
    $region9: #{tpu_custom_call.1} parent=1 // pred_fallthru
      _
    // Predicated region
    $region10: #{tpu_custom_call.1} parent=1 // pred_check
      _
    $region11: #{tpu_custom_call.1} parent=1 // pred_check_branch
      %36 = sbr.rel (0) target = $region13
    $region12: #{tpu_custom_call.1} parent=1 // pred_region
      _
    $region13: #{tpu_custom_call.1} parent=1 // pred_fallthru
      _
    // Predicated region
    $region14: #{tpu_custom_call.1} parent=1 // pred_check
      _
    $region15: #{tpu_custom_call.1} parent=1 // pred_check_branch
      %38 = sbr.rel (0) target = $region17
    $region16: #{tpu_custom_call.1} parent=1 // pred_region
      %39 = dma.done [#allocation4], 256
    $region17: #{tpu_custom_call.1} parent=1 // pred_fallthru
      _
    // Predicated region
    $region18: #{tpu_custom_call.1} parent=1 // pred_check
      _
    $region19: #{tpu_custom_call.1} parent=1 // pred_check_branch
      %41 = sbr.rel (0) target = $region21
    $region20: #{tpu_custom_call.1} parent=1 // pred_region
      %42 = dma.done [#allocation7], 1024
    $region21: #{tpu_custom_call.1} parent=1 // pred_fallthru
      _
    %p44 = scmp.eq.s32.totalorder 0, 0
    // Predicated region
    $region22: #{tpu_custom_call.1} parent=1 // pred_check
      %p45 = pneg %p44
    $region23: #{tpu_custom_call.1} parent=1 // pred_check_branch
      %47 = sbr.rel (%p45) target = $region25
    $region24: #{tpu_custom_call.1} parent=1 // pred_region
      %48 = vst [vmem:[#allocation2] sm:$0xff] 0.0
      %49 = vst [vmem:[#allocation2 + $0x8] sm:$0xff] 0.0
    $region25: #{tpu_custom_call.1} parent=1 // pred_fallthru
      _
    %v50 = vld [vmem:[#allocation2] sm:$0xff]
    %v51 = vld [vmem:[#allocation2 + $0x8] sm:$0xff]
    %v52 = vld [vmem:[#allocation3] sm:$0xff]
    %v53 = vld [vmem:[#allocation3 + $0x8] sm:$0xff]
    %v54 = vpack.c.bf16 %v53, %v52
    %v55 = vld [vmem:[#allocation6] sm:$0xf]
    %v56 = vld [vmem:[#allocation6 + $0x4] sm:$0xf]
    %v57 = vld [vmem:[#allocation6 + $0x8] sm:$0xf]
    %v58 = vld [vmem:[#allocation6 + $0xc] sm:$0xf]
    %v59 = vld [vmem:[#allocation6 + $0x10] sm:$0xf]
    %v60 = vld [vmem:[#allocation6 + $0x14] sm:$0xf]
    %v61 = vld [vmem:[#allocation6 + $0x18] sm:$0xf]
    %v62 = vld [vmem:[#allocation6 + $0x1c] sm:$0xf]
    %v63 = vld [vmem:[#allocation6 + $0x20] sm:$0xf]
    %v64 = vld [vmem:[#allocation6 + $0x24] sm:$0xf]
    %v65 = vld [vmem:[#allocation6 + $0x28] sm:$0xf]
    %v66 = vld [vmem:[#allocation6 + $0x2c] sm:$0xf]
    %v67 = vld [vmem:[#allocation6 + $0x30] sm:$0xf]
    %v68 = vld [vmem:[#allocation6 + $0x34] sm:$0xf]
    %v69 = vld [vmem:[#allocation6 + $0x38] sm:$0xf]
    %v70 = vld [vmem:[#allocation6 + $0x3c] sm:$0xf]
    %v87 = vunpack.c.l.b16 %v55
    %v88 = vunpack.c.l.b16 %v56
    %v89 = vunpack.c.l.b16 %v57
    %v90 = vunpack.c.l.b16 %v58
    %v91 = vunpack.c.l.b16 %v59
    %v92 = vunpack.c.l.b16 %v60
    %v93 = vunpack.c.l.b16 %v61
    %v94 = vunpack.c.l.b16 %v62
    %v95 = vunpack.c.l.b16 %v63
    %v96 = vunpack.c.l.b16 %v64
    %v97 = vunpack.c.l.b16 %v65
    %v98 = vunpack.c.l.b16 %v66
    %v99 = vunpack.c.l.b16 %v67
    %v100 = vunpack.c.l.b16 %v68
    %v101 = vunpack.c.l.b16 %v69
    %v102 = vunpack.c.l.b16 %v70
    %v103 = vpack.c.b16 %v88, %v87
    %v104 = vpack.c.b16 %v90, %v89
    %v105 = vpack.c.b16 %v92, %v91
    %v106 = vpack.c.b16 %v94, %v93
    %v107 = vpack.c.b16 %v96, %v95
    %v108 = vpack.c.b16 %v98, %v97
    %v109 = vpack.c.b16 %v100, %v99
    %v110 = vpack.c.b16 %v102, %v101
    %119 = vmatprep.subr.bf16.mxu0 0
    %120 = vmatpush1.bf16.msra.mxu0 %v103
    %121 = vmatprep.subr.bf16.mxu0 0
    %122 = vmatpush1.bf16.msra.mxu0 %v104
    %123 = vmatprep.subr.bf16.mxu0 0
    %124 = vmatpush1.bf16.msra.mxu0 %v105
    %125 = vmatprep.subr.bf16.mxu0 0
    %126 = vmatpush1.bf16.msra.mxu0 %v106
    %127 = vmatprep.subr.bf16.mxu0 0
    %128 = vmatpush1.bf16.msra.mxu0 %v107
    %129 = vmatprep.subr.bf16.mxu0 0
    %130 = vmatpush1.bf16.msra.mxu0 %v108
    %131 = vmatprep.subr.bf16.mxu0 0
    %132 = vmatpush1.bf16.msra.mxu0 %v109
    %133 = vmatprep.subr.bf16.mxu0 0
    %134 = vmatpush1.bf16.msra.mxu0 %v110
    %135 = vmatprep.subr.bf16.mxu0 0
    %136 = vmatpush1.bf16.msra.mxu0 0
    %137 = vmatprep.subr.bf16.mxu0 0
    %138 = vmatpush1.bf16.msra.mxu0 0
    %139 = vmatprep.subr.bf16.mxu0 0
    %140 = vmatpush1.bf16.msra.mxu0 0
    %141 = vmatprep.subr.bf16.mxu0 0
    %142 = vmatpush1.bf16.msra.mxu0 0
    %143 = vmatprep.subr.bf16.mxu0 0
    %144 = vmatpush1.bf16.msra.mxu0 0
    %145 = vmatprep.subr.bf16.mxu0 0
    %146 = vmatpush1.bf16.msra.mxu0 0
    %147 = vmatprep.subr.bf16.mxu0 0
    %148 = vmatpush1.bf16.msra.mxu0 0
    %149 = vmatprep.subr.bf16.mxu0 0
    %150 = vmatpush1.bf16.msra.mxu0 0
    %151 = vmatprep.mubr.bf16.mxu0 0
    %152 = vmatmul.mubr.bf16.gmra.mrb[0].mxu0 %v54
    %v153 = vpop.f32.mrb[0].mxu0
    %v154 = vadd.f32 0.0, %v153
    %v155 = vpop.f32.mrb[0].mxu0
    %v156 = vpop.f32.mrb[0].mxu0
    %v157 = vadd.f32 0.0, %v156
    %v158 = vpop.f32.mrb[0].mxu0
    %159 = vdwg.mxu0
    %v160 = vadd.f32 %v50, %v154
    %v161 = vadd.f32 %v51, %v157
    %162 = vst [vmem:[#allocation2] sm:$0xff] %v160
    %163 = vst [vmem:[#allocation2 + $0x8] sm:$0xff] %v161
    // Predicated region
    $region26: #{tpu_custom_call.1} parent=1 // pred_check
      %p164 = pneg %p44
    $region27: #{tpu_custom_call.1} parent=1 // pred_check_branch
      %166 = sbr.rel (%p164) target = $region29
    $region28: #{tpu_custom_call.1} parent=1 // pred_region
      %v167 = vld [vmem:[#allocation2] sm:$0xff]
      %v168 = vld [vmem:[#allocation2 + $0x8] sm:$0xff]
      %v169 = vld [vmem:[%s2] sm:$0x1]
      %v171 = vlaneseq
      %v172 = vshrl.u32 %v171, 7
      %v173 = vsub.s32 0, %v172
      %v174 = vrot.slane %v169, %v173
      %v176 = vadd.f32 %v167, %v174
      %v177 = vadd.f32 %v168, %v174
      %v178 = vmax.f32 %v176, 0.0
      %v179 = vmax.f32 %v177, 0.0
      %180 = vst [vmem:[#allocation8] sm:$0xff] %v178
      %181 = vst [vmem:[#allocation8 + $0x8] sm:$0xff] %v179
    $region29: #{tpu_custom_call.1} parent=1 // pred_fallthru
      _
    // Predicated region
    $region30: #{tpu_custom_call.1} parent=1 // pred_check
      _
    $region31: #{tpu_custom_call.1} parent=1 // pred_check_branch
      %183 = sbr.rel (0) target = $region33
    $region32: #{tpu_custom_call.1} parent=1 // pred_region
      %s185 = ssub.s32 256, 256
      %186 = vsyncadd [#allocation5], %s185
      %s187 = sshll.u32 [#allocation8], 4
      %s188 = int_to_ptr.vmem [resolvable:$true] %s187
      %193 = dma.vmem_to_hbm [thread:$0]  %s188, 256, %s3, [#allocation5], 128, 128, 8
    $region33: #{tpu_custom_call.1} parent=1 // pred_fallthru
      _
    // Predicated region
    $region34: #{tpu_custom_call.1} parent=1 // pred_check
      _
    $region35: #{tpu_custom_call.1} parent=1 // pred_check_branch
      %195 = sbr.rel (0) target = $region37
    $region36: #{tpu_custom_call.1} parent=1 // pred_region
      %196 = dma.done [#allocation5], 256
    $region37: #{tpu_custom_call.1} parent=1 // pred_fallthru
      _
    %197 = vsyncpa [#allocation4], 1
    %198 = vsyncpa [#allocation7], 1
    %199 = vsyncpa [#allocation5], 1

</llo_original>
